<compile_context>
chip_gen: v6e
topology: v6e:2x2x1
jax: 0.10.0
libtpu: 0.0.40
codegen_flags: <defaults>
</compile_context>

<pallas_src>
import functools
import re

import jax
import jax.numpy as jnp
from jax.experimental import pallas as pl
from jax.experimental.pallas import tpu as pltpu

_LANES = 128
_MiB = 1024 * 1024


@functools.lru_cache(maxsize=None)
def _tpu_generation():
    """Best-effort TPU generation number (4/5/6/7/...); defaults to 6."""
    try:
        kind = jax.devices()[0].device_kind.lower()
    except Exception:
        return 6
    m = re.search(r"(\d+)", kind)
    return int(m.group(1)) if m else 6


def _soft_dice_kernel(m1_ref, m2_ref, num_out_ref, den_out_ref,
                      num_acc, den_acc, *,
                      n, r, tile_rows, acc_rows, half_tiles, any_oob):
    """Accumulate per-sample sums over row-tiles; emit partials on last step.

    m1_ref, m2_ref       : (N, tile_rows, 128) VMEM tiles of the repacked inputs
    num_out_ref, den_out_ref : (1, 1, N) per-split partial sums
    num_acc, den_acc     : (N, acc_rows, 128) f32 resident accumulators
    """
    p = pl.program_id(0)          # parallel split (megacore half on v7x)
    k = pl.program_id(1)          # row-tile step within this split

    @pl.when(k == 0)
    def _init():
        num_acc[...] = jnp.zeros_like(num_acc)
        den_acc[...] = jnp.zeros_like(den_acc)

    def _accumulate(m1, m2):
        m1 = m1.astype(jnp.float32)
        m2 = m2.astype(jnp.float32)
        prod = m1 * m2
        both = m1 + m2
        if tile_rows == acc_rows:
            num_acc[...] += prod
            den_acc[...] += both
        else:
            # Fold groups of `acc_rows` sublanes with pure VPU adds; the
            # cross-lane (XLU) reduction happens once, in the finalize.
            num_acc[...] += jnp.sum(prod.reshape(n, -1, acc_rows, _LANES), axis=1)
            den_acc[...] += jnp.sum(both.reshape(n, -1, acc_rows, _LANES), axis=1)

    if any_oob:
        # Only the last (ragged) tile — or a fully out-of-range tile when a
        # 2-way split is uneven — pays for the iota/compare/select mask; every
        # full tile takes the unmasked path.
        tile_idx = p * half_tiles + k
        is_full = (tile_idx + 1) * tile_rows <= r

        @pl.when(is_full)
        def _accum_full():
            _accumulate(m1_ref[...], m2_ref[...])

        @pl.when(jnp.logical_not(is_full))
        def _accum_masked():
            row = jax.lax.broadcasted_iota(jnp.int32, (n, tile_rows, _LANES), 1)
            keep = (tile_idx * tile_rows + row) < r
            m1 = jnp.where(keep, m1_ref[...].astype(jnp.float32), 0.0)
            m2 = jnp.where(keep, m2_ref[...].astype(jnp.float32), 0.0)
            _accumulate(m1, m2)
    else:
        _accumulate(m1_ref[...], m2_ref[...])

    @pl.when(k == half_tiles - 1)
    def _finalize():
        # Single cross-lane + cross-sublane reduction per split, exact f32.
        numer = jnp.sum(jnp.sum(num_acc[...], axis=2), axis=1)   # (n,)
        denom = jnp.sum(jnp.sum(den_acc[...], axis=2), axis=1)   # (n,)
        num_out_ref[...] = numer.reshape(1, 1, n)
        den_out_ref[...] = denom.reshape(1, 1, n)


@jax.jit
def soft_dice_loss(inputs, targets):
    """SoftDiceLoss forward: 1 - mean_n[(2*sum(m1*m2)+1) / (sum(m1)+sum(m2)+1)]."""
    num = inputs.shape[0]
    m1 = inputs.reshape(num, -1)
    m2 = targets.reshape(num, -1)
    d = m1.shape[1]

    # Per-generation tiling plan (trace-time Python).
    gen = _tpu_generation()
    if gen >= 7:
        # v7x: 2 TensorCores, 64 MiB physical VMEM, ~3.2 TB/s HBM.
        block_bytes, vmem_limit, splits = 4 * _MiB, 48 * _MiB, 2
    elif gen == 6:
        # v6e: ~1.4 TB/s HBM, 128 MiB physical VMEM -> bigger blocks are free.
        block_bytes, vmem_limit, splits = 4 * _MiB, 64 * _MiB, 1
    else:
        # v5e and older: 2 MiB steps already near the HBM roofline; the
        # explicit 32 MiB limit raises v5e's 16 MiB scoped default.
        block_bytes, vmem_limit, splits = 2 * _MiB, 32 * _MiB, 1

    # Lane-align D to a multiple of 128 (zeros are sum-neutral; <=127 elems,
    # skipped entirely in the common D % 128 == 0 case).
    r = int(pl.cdiv(d, _LANES))
    d_pad = r * _LANES
    if d_pad != d:
        m1 = jnp.pad(m1, ((0, 0), (0, d_pad - d)))
        m2 = jnp.pad(m2, ((0, 0), (0, d_pad - d)))
    m1 = m1.reshape(num, r, _LANES)
    m2 = m2.reshape(num, r, _LANES)

    itemsize = max(jnp.dtype(m1.dtype).itemsize, jnp.dtype(m2.dtype).itemsize)
    sublane = max(8, 32 // itemsize)        # 8 (f32) / 16 (bf16) / 32 (int8)

    # VMEM accounting per pipeline step (per core):
    #   2 inputs x 2 pipeline buffers x (num * tile_rows * 128 * itemsize)
    # + up to 4 f32 intermediates of the same tile (m1/m2 upcasts, prod, both).
    # The (num, 8, 128) accumulators and (1,1,num) output blocks are noise.
    row_in_bytes = num * _LANES * itemsize
    row_f32_bytes = num * _LANES * 4
    per_row_vmem = 2 * 2 * row_in_bytes + 4 * row_f32_bytes
    budget = vmem_limit - 12 * _MiB         # headroom for compiler scratch
    rows_cap = max(1, min(budget // per_row_vmem, block_bytes // row_in_bytes))

    if r <= rows_cap:
        tile_rows = r                        # single tile; full-dim block is legal
    else:
        tile_rows = max(sublane, (rows_cap // sublane) * sublane)
    tile_rows = int(tile_rows)
    acc_rows = 8 if tile_rows % 8 == 0 else tile_rows

    n_tiles = int(pl.cdiv(r, tile_rows))
    splits = int(min(splits, n_tiles))
    half_tiles = int(pl.cdiv(n_tiles, splits))
    # True iff the very last handled tile is ragged (or, with an uneven 2-way
    # split, entirely past the end); only those tiles take the masked path.
    any_oob = bool(splits * half_tiles * tile_rows > r)

    kernel = functools.partial(
        _soft_dice_kernel,
        n=num, r=r, tile_rows=tile_rows, acc_rows=acc_rows,
        half_tiles=half_tiles, any_oob=any_oob)

    def in_map(p, k):
        # Clamp so a fully-out-of-range tile (odd tile count, 2-way split)
        # still DMAs a legal block; its rows are zeroed by the keep-mask.
        return (0, jnp.minimum(p * half_tiles + k, n_tiles - 1), 0)

    num_part, den_part = pl.pallas_call(
        kernel,
        out_shape=(
            jax.ShapeDtypeStruct((splits, 1, num), jnp.float32),
            jax.ShapeDtypeStruct((splits, 1, num), jnp.float32),
        ),
        grid_spec=pltpu.PrefetchScalarGridSpec(
            num_scalar_prefetch=0,
            grid=(splits, half_tiles),
            in_specs=[
                pl.BlockSpec((num, tile_rows, _LANES), in_map),
                pl.BlockSpec((num, tile_rows, _LANES), in_map),
            ],
            out_specs=[
                pl.BlockSpec((1, 1, num), lambda p, k: (p, 0, 0)),
                pl.BlockSpec((1, 1, num), lambda p, k: (p, 0, 0)),
            ],
            scratch_shapes=[
                pltpu.VMEM((num, acc_rows, _LANES), jnp.float32),
                pltpu.VMEM((num, acc_rows, _LANES), jnp.float32),
            ],
        ),
        compiler_params=pltpu.CompilerParams(
            dimension_semantics=("parallel", "arbitrary"),
            vmem_limit_bytes=int(vmem_limit),
        ),
    )(m1, m2)

    # Combine per-split partials and finalize exactly (no approx reciprocal).
    smooth = jnp.float32(1.0)
    numer = jnp.sum(num_part, axis=(0, 1))   # (num,)
    denom = jnp.sum(den_part, axis=(0, 1))   # (num,)
    score = (2.0 * numer + smooth) / (denom + smooth)
    dice = jnp.sum(score) / jnp.float32(num)
    return jnp.float32(1.0) - dice


def _reference(inputs, targets):
    smooth = 1.0
    num = inputs.shape[0]
    m1 = inputs.reshape(num, -1)
    m2 = targets.reshape(num, -1)
    intersection = m1 * m2
    score = (2.0 * intersection.sum(1) + smooth) / (m1.sum(1) + m2.sum(1) + smooth)
    dice = score.sum() / num
    return 1.0 - dice


if __name__ == "__main__":
    key = jax.random.PRNGKey(0)
    k1, k2 = jax.random.split(key)

    # Small NCHW shapes: batch=2, channels=4, spatial=16x16.
    inputs = jax.nn.sigmoid(jax.random.normal(k1, (2, 4, 16, 16), dtype=jnp.float32))
    targets = (jax.random.uniform(k2, (2, 4, 16, 16)) > 0.5).astype(jnp.float32)

    loss = soft_dice_loss(inputs, targets)
    jax.block_until_ready(loss)

    ref = _reference(inputs, targets)
    assert jnp.allclose(loss, ref, atol=1e-5, rtol=1e-5), (loss, ref)

    print("KERNEL_OK")
</pallas_src>

<mosaic_0001>
module attributes {stable_mosaic.version = 11 : i64} {
  func.func @_soft_dice_kernel(%arg0: i32, %arg1: i32, %arg2: memref<2x8x128xf32, #tpu.memory_space<vmem>>, %arg3: memref<2x8x128xf32, #tpu.memory_space<vmem>>, %arg4: memref<1x1x2xf32, #tpu.memory_space<vmem>>, %arg5: memref<1x1x2xf32, #tpu.memory_space<vmem>>, %arg6: memref<2x8x128xf32, #tpu.memory_space<vmem>>, %arg7: memref<2x8x128xf32, #tpu.memory_space<vmem>>) attributes {dimension_semantics = [#tpu.dimension_semantics<parallel>, #tpu.dimension_semantics<arbitrary>], iteration_bounds = array<i64: 1, 1>, scalar_prefetch = 0 : i64, scratch_operands = 2 : i64, tpu.core_type = #tpu.core_type<tc>, window_params = [{transform_indices = @transform_0, window_bounds = array<i64: 2, 8, 128>}, {transform_indices = @transform_1, window_bounds = array<i64: 2, 8, 128>}, {transform_indices = @transform_2, window_bounds = array<i64: 1, 1, 2>}, {transform_indices = @transform_3, window_bounds = array<i64: 1, 1, 2>}]} {
    %c0_i32 = arith.constant 0 : i32
    %0 = arith.cmpi eq, %arg1, %c0_i32 : i32
    %1 = arith.extui %0 : i1 to i32
    %c0_i32_0 = arith.constant 0 : i32
    %2 = arith.cmpi ne, %1, %c0_i32_0 : i32
    scf.if %2 {
      %cst = arith.constant 0.000000e+00 : f32
      %16 = vector.broadcast %cst : f32 to vector<2x8x128xf32>
      %c0_20 = arith.constant 0 : index
      %c0_21 = arith.constant 0 : index
      %c0_22 = arith.constant 0 : index
      %17 = vector.load %arg6[%c0_20, %c0_21, %c0_22] : memref<2x8x128xf32, #tpu.memory_space<vmem>>, vector<2x8x128xf32>
      tpu.vector_store %arg6[%c0_20, %c0_21, %c0_22], %16 {strides = array<i32>} : memref<2x8x128xf32, #tpu.memory_space<vmem>>, vector<2x8x128xf32>,
      %cst_23 = arith.constant 0.000000e+00 : f32
      %18 = vector.broadcast %cst_23 : f32 to vector<2x8x128xf32>
      %c0_24 = arith.constant 0 : index
      %c0_25 = arith.constant 0 : index
      %c0_26 = arith.constant 0 : index
      %19 = vector.load %arg7[%c0_24, %c0_25, %c0_26] : memref<2x8x128xf32, #tpu.memory_space<vmem>>, vector<2x8x128xf32>
      tpu.vector_store %arg7[%c0_24, %c0_25, %c0_26], %18 {strides = array<i32>} : memref<2x8x128xf32, #tpu.memory_space<vmem>>, vector<2x8x128xf32>,
    } else {
    }
    %c0 = arith.constant 0 : index
    %c0_1 = arith.constant 0 : index
    %c0_2 = arith.constant 0 : index
    %3 = vector.load %arg2[%c0, %c0_1, %c0_2] : memref<2x8x128xf32, #tpu.memory_space<vmem>>, vector<2x8x128xf32>
    %c0_3 = arith.constant 0 : index
    %c0_4 = arith.constant 0 : index
    %c0_5 = arith.constant 0 : index
    %4 = vector.load %arg3[%c0_3, %c0_4, %c0_5] : memref<2x8x128xf32, #tpu.memory_space<vmem>>, vector<2x8x128xf32>
    %5 = arith.mulf %3, %4 : vector<2x8x128xf32>
    %6 = arith.addf %3, %4 : vector<2x8x128xf32>
    %c0_6 = arith.constant 0 : index
    %c0_7 = arith.constant 0 : index
    %c0_8 = arith.constant 0 : index
    %7 = vector.load %arg6[%c0_6, %c0_7, %c0_8] : memref<2x8x128xf32, #tpu.memory_space<vmem>>, vector<2x8x128xf32>
    %8 = arith.addf %7, %5 : vector<2x8x128xf32>
    %c0_9 = arith.constant 0 : index
    %c0_10 = arith.constant 0 : index
    %c0_11 = arith.constant 0 : index
    %9 = vector.load %arg6[%c0_9, %c0_10, %c0_11] : memref<2x8x128xf32, #tpu.memory_space<vmem>>, vector<2x8x128xf32>
    tpu.vector_store %arg6[%c0_9, %c0_10, %c0_11], %8 {strides = array<i32>} : memref<2x8x128xf32, #tpu.memory_space<vmem>>, vector<2x8x128xf32>,
    %c0_12 = arith.constant 0 : index
    %c0_13 = arith.constant 0 : index
    %c0_14 = arith.constant 0 : index
    %10 = vector.load %arg7[%c0_12, %c0_13, %c0_14] : memref<2x8x128xf32, #tpu.memory_space<vmem>>, vector<2x8x128xf32>
    %11 = arith.addf %10, %6 : vector<2x8x128xf32>
    %c0_15 = arith.constant 0 : index
    %c0_16 = arith.constant 0 : index
    %c0_17 = arith.constant 0 : index
    %12 = vector.load %arg7[%c0_15, %c0_16, %c0_17] : memref<2x8x128xf32, #tpu.memory_space<vmem>>, vector<2x8x128xf32>
    tpu.vector_store %arg7[%c0_15, %c0_16, %c0_17], %11 {strides = array<i32>} : memref<2x8x128xf32, #tpu.memory_space<vmem>>, vector<2x8x128xf32>,
    %c0_i32_18 = arith.constant 0 : i32
    %13 = arith.cmpi eq, %arg1, %c0_i32_18 : i32
    %14 = arith.extui %13 : i1 to i32
    %c0_i32_19 = arith.constant 0 : i32
    %15 = arith.cmpi ne, %14, %c0_i32_19 : i32
    scf.if %15 {
      %c0_20 = arith.constant 0 : index
      %c0_21 = arith.constant 0 : index
      %c0_22 = arith.constant 0 : index
      %16 = vector.load %arg6[%c0_20, %c0_21, %c0_22] : memref<2x8x128xf32, #tpu.memory_space<vmem>>, vector<2x8x128xf32>
      %cst = arith.constant dense<0.000000e+00> : vector<2x8xf32>
      %17 = vector.multi_reduction <add>, %16, %cst [2] : vector<2x8x128xf32> to vector<2x8xf32>
      %cst_23 = arith.constant dense<0.000000e+00> : vector<2xf32>
      %18 = vector.multi_reduction <add>, %17, %cst_23 [1] : vector<2x8xf32> to vector<2xf32>
      %c0_24 = arith.constant 0 : index
      %c0_25 = arith.constant 0 : index
      %c0_26 = arith.constant 0 : index
      %19 = vector.load %arg7[%c0_24, %c0_25, %c0_26] : memref<2x8x128xf32, #tpu.memory_space<vmem>>, vector<2x8x128xf32>
      %cst_27 = arith.constant dense<0.000000e+00> : vector<2x8xf32>
      %20 = vector.multi_reduction <add>, %19, %cst_27 [2] : vector<2x8x128xf32> to vector<2x8xf32>
      %cst_28 = arith.constant dense<0.000000e+00> : vector<2xf32>
      %21 = vector.multi_reduction <add>, %20, %cst_28 [1] : vector<2x8xf32> to vector<2xf32>
      %22 = vector.shape_cast %18 : vector<2xf32> to vector<1x1x2xf32>
      %c0_29 = arith.constant 0 : index
      %c0_30 = arith.constant 0 : index
      %c0_31 = arith.constant 0 : index
      %23 = vector.load %arg4[%c0_29, %c0_30, %c0_31] : memref<1x1x2xf32, #tpu.memory_space<vmem>>, vector<1x1x2xf32>
      tpu.vector_store %arg4[%c0_29, %c0_30, %c0_31], %22 {strides = array<i32>} : memref<1x1x2xf32, #tpu.memory_space<vmem>>, vector<1x1x2xf32>,
      %24 = vector.shape_cast %21 : vector<2xf32> to vector<1x1x2xf32>
      %c0_32 = arith.constant 0 : index
      %c0_33 = arith.constant 0 : index
      %c0_34 = arith.constant 0 : index
      %25 = vector.load %arg5[%c0_32, %c0_33, %c0_34] : memref<1x1x2xf32, #tpu.memory_space<vmem>>, vector<1x1x2xf32>
      tpu.vector_store %arg5[%c0_32, %c0_33, %c0_34], %24 {strides = array<i32>} : memref<1x1x2xf32, #tpu.memory_space<vmem>>, vector<1x1x2xf32>,
    } else {
    }
    return
  }
  func.func @transform_0(%arg0: i32, %arg1: i32) -> (i32, i32, i32) {
    %c1_i32 = arith.constant 1 : i32
    %0 = arith.muli %arg0, %c1_i32 : i32
    %1 = arith.addi %0, %arg1 : i32
    %c0_i32 = arith.constant 0 : i32
    %2 = arith.minsi %1, %c0_i32 : i32
    %c0_i32_0 = arith.constant 0 : i32
    %c0_i32_1 = arith.constant 0 : i32
    %c0_i32_2 = arith.constant 0 : i32
    return %c0_i32_0, %2, %c0_i32_1 : i32, i32, i32
  }
  func.func @transform_1(%arg0: i32, %arg1: i32) -> (i32, i32, i32) {
    %c1_i32 = arith.constant 1 : i32
    %0 = arith.muli %arg0, %c1_i32 : i32
    %1 = arith.addi %0, %arg1 : i32
    %c0_i32 = arith.constant 0 : i32
    %2 = arith.minsi %1, %c0_i32 : i32
    %c0_i32_0 = arith.constant 0 : i32
    %c0_i32_1 = arith.constant 0 : i32
    %c0_i32_2 = arith.constant 0 : i32
    return %c0_i32_0, %2, %c0_i32_1 : i32, i32, i32
  }
  func.func @transform_2(%arg0: i32, %arg1: i32) -> (i32, i32, i32) {
    %c0_i32 = arith.constant 0 : i32
    %c0_i32_0 = arith.constant 0 : i32
    %c0_i32_1 = arith.constant 0 : i32
    return %arg0, %c0_i32, %c0_i32_0 : i32, i32, i32
  }
  func.func @transform_3(%arg0: i32, %arg1: i32) -> (i32, i32, i32) {
    %c0_i32 = arith.constant 0 : i32
    %c0_i32_0 = arith.constant 0 : i32
    %c0_i32_1 = arith.constant 0 : i32
    return %arg0, %c0_i32, %c0_i32_0 : i32, i32, i32
  }
}

</mosaic_0001>

<llo_original>
// kernel: soft_dice_loss.1
$region0: #{soft_dice_loss.1}
  #allocation0 [shape = 'u32[]', space=smem, size = 0x4, offset = 0x4, fixed_abs, tag = 'smem constant byte address 0x4 - core index']
  #allocation1 [shape = 'u32[144,128]{1,0:T(1,128)}', space=vmem, size = 0x12000, scoped, tag = 'internal scratch']
  #allocation2 [shape = 'f32[2,8,128]{2,1,0:T(8,128)}', space=vmem, size = 0x2000, scoped, tag = 'scratch operand']
  #allocation3 [shape = 'f32[2,8,128]{2,1,0:T(8,128)}', space=vmem, size = 0x2000, scoped, tag = 'scratch operand']
  %s0 = inlined_call_operand.vmem [shape: f32[2,8,128], index: 0, kind: input, shape index: {}]
  %s1 = inlined_call_operand.vmem [shape: f32[2,8,128], index: 1, kind: input, shape index: {}]
  %s2 = inlined_call_operand.vmem [shape: f32[1,1,2], index: 2, kind: output, shape index: {0}]
  %s3 = inlined_call_operand.vmem [shape: f32[1,1,2], index: 3, kind: output, shape index: {1}]
  %4 = xla_tuple %s2, %s3
  %s5 = sld [smem:[#allocation0]]
  $region34: #{soft_dice_loss.1} parent=0
    _
  %s7 = ssub.s32 1, %s5
  %s8 = scalar_select 0, %s7, %s5
  // Predicated region
  $region2: #{soft_dice_loss.1} parent=0 // pred_check
    _
  $region3: #{soft_dice_loss.1} parent=0 // pred_check_branch
    %10 = sbr.rel (0) target = $region5
  $region4: #{soft_dice_loss.1} parent=0 // pred_region
    %s11 = sadd.s32 0, 0
    %p12 = scmp.lt.s32.totalorder %s11, 0
    %s13 = scalar_select %p12, %s11, 0
    %p14 = scmp.lt.s32.totalorder %s13, 0
    %s15 = scalar_select %p14, %s13, 0
    %s16 = smul.addr %s15, 8
    %s17 = scalar_lea.vmem %s0, %s16
    %s18 = sadd.s32 0, 0
    %p19 = scmp.lt.s32.totalorder %s18, 0
    %s20 = scalar_select %p19, %s18, 0
  $region5: #{soft_dice_loss.1} parent=0 // pred_fallthru
    _
  // Predicated region
  $region6: #{soft_dice_loss.1} parent=0 // pred_check
    _
  $region7: #{soft_dice_loss.1} parent=0 // pred_check_branch
    %22 = sbr.rel (0) target = $region9
  $region8: #{soft_dice_loss.1} parent=0 // pred_region
    %s23 = sadd.s32 0, 0
    %p24 = scmp.lt.s32.totalorder %s23, 0
    %s25 = scalar_select %p24, %s23, 0
    %p26 = scmp.lt.s32.totalorder %s25, 0
    %s27 = scalar_select %p26, %s25, 0
    %s28 = smul.addr %s27, 8
    %s29 = scalar_lea.vmem %s1, %s28
    %s30 = sadd.s32 0, 0
    %p31 = scmp.lt.s32.totalorder %s30, 0
    %s32 = scalar_select %p31, %s30, 0
  $region9: #{soft_dice_loss.1} parent=0 // pred_fallthru
    _
  %s33 = sadd.s32 0, 0
  %p34 = scmp.lt.s32.totalorder %s33, 0
  %s35 = scalar_select %p34, %s33, 0
  %p36 = scmp.lt.s32.totalorder %s35, 0
  %s37 = scalar_select %p36, %s35, 0
  %s38 = smul.addr %s37, 8
  %s39 = scalar_lea.vmem %s0, %s38
  %s40 = sadd.s32 0, 0
  %p41 = scmp.lt.s32.totalorder %s40, 0
  %s42 = scalar_select %p41, %s40, 0
  %p43 = scmp.lt.s32.totalorder %s42, 0
  %s44 = scalar_select %p43, %s42, 0
  %s45 = smul.addr %s44, 8
  %s46 = scalar_lea.vmem %s1, %s45
  %s47 = sadd.s32 0, 0
  %p48 = scmp.lt.s32.totalorder %s47, 0
  %s49 = scalar_select %p48, %s47, 0
  %p50 = scmp.lt.s32.totalorder %s49, 0
  %s51 = scalar_select %p50, %s49, 0
  %s52 = smul.addr %s51, 8
  %s53 = scalar_lea.vmem %s0, %s52
  %s54 = sadd.s32 0, 0
  %p55 = scmp.lt.s32.totalorder %s54, 0
  %s56 = scalar_select %p55, %s54, 0
  %s57 = sadd.s32 0, 0
  %p58 = scmp.lt.s32.totalorder %s57, 0
  %s59 = scalar_select %p58, %s57, 0
  %p60 = scmp.lt.s32.totalorder %s59, 0
  %s61 = scalar_select %p60, %s59, 0
  %s62 = smul.addr %s61, 8
  %s63 = scalar_lea.vmem %s1, %s62
  %s64 = sadd.s32 0, 0
  %p65 = scmp.lt.s32.totalorder %s64, 0
  %s66 = scalar_select %p65, %s64, 0
  %p67 = scmp.eq.s32.totalorder 0, 0
  // Predicated region
  $region10: #{soft_dice_loss.1} parent=0 // pred_check
    %p68 = pneg %p67
  $region11: #{soft_dice_loss.1} parent=0 // pred_check_branch
    %70 = sbr.rel (%p68) target = $region13
  $region12: #{soft_dice_loss.1} parent=0 // pred_region
    %71 = vst [vmem:[#allocation2] sm:$0xff] 0.0
    %72 = vst [vmem:[#allocation2 + $0x8] sm:$0xff] 0.0
    %73 = vst [vmem:[#allocation3] sm:$0xff] 0.0
    %74 = vst [vmem:[#allocation3 + $0x8] sm:$0xff] 0.0
  $region13: #{soft_dice_loss.1} parent=0 // pred_fallthru
    _
  %v75 = vld [vmem:[%s53] sm:$0xff]
  %v76 = vld [vmem:[%s53 + $0x8] sm:$0xff]
  %v77 = vld [vmem:[%s63] sm:$0xff]
  %v78 = vld [vmem:[%s63 + $0x8] sm:$0xff]
  %v79 = vmul.f32 %v75, %v77
  %v80 = vmul.f32 %v76, %v78
  %v81 = vadd.f32 %v75, %v77
  %v82 = vadd.f32 %v76, %v78
  %v83 = vld [vmem:[#allocation2] sm:$0xff]
  %v84 = vld [vmem:[#allocation2 + $0x8] sm:$0xff]
  %v85 = vadd.f32 %v83, %v79
  %v86 = vadd.f32 %v84, %v80
  %87 = vst [vmem:[#allocation2] sm:$0xff] %v85
  %88 = vst [vmem:[#allocation2 + $0x8] sm:$0xff] %v86
  %v89 = vld [vmem:[#allocation3] sm:$0xff]
  %v90 = vld [vmem:[#allocation3 + $0x8] sm:$0xff]
  %v91 = vadd.f32 %v89, %v81
  %v92 = vadd.f32 %v90, %v82
  %93 = vst [vmem:[#allocation3] sm:$0xff] %v91
  %94 = vst [vmem:[#allocation3 + $0x8] sm:$0xff] %v92
  // Predicated region
  $region14: #{soft_dice_loss.1} parent=0 // pred_check
    %p95 = pneg %p67
  $region15: #{soft_dice_loss.1} parent=0 // pred_check_branch
    %97 = sbr.rel (%p95) target = $region17
  $region16: #{soft_dice_loss.1} parent=0 // pred_region
    %v98 = vld [vmem:[#allocation2] sm:$0xff]
    %v99 = vld [vmem:[#allocation2 + $0x8] sm:$0xff]
    %100 = vadd.xlane.f32.xlu0 %v98
    %v101 = vpop.xlane.xlu0 %100
    %102 = vadd.xlane.f32.xlu0 %v99
    %v103 = vpop.xlane.xlu0 %102
    %v106 = vlaneseq
    %v107 = vand.u32 %v106, 127
    %v108 = vlaneseq
    %v109 = vshrl.u32 %v108, 7
    %v110 = vsub.s32 %v107, %v109
    %v111 = vrot.slane %v101, %v110
    %v112 = vlaneseq
    %v113 = vshrl.u32 %v112, 7
    %v114 = vsub.s32 %v107, %v113
    %v115 = vrot.slane %v103, %v114
    %vm116 = vcmask 1041409
    %v117 = vsel %vm116, %v115, %v111
    %vm119 = vcmask 58368
    %v120 = vsel %vm119, %v117, 0.0
    %121 = vadd.xlane.f32.xlu0 %v120
    %v122 = vpop.xlane.xlu0 %121
    %v123 = vld [vmem:[#allocation3] sm:$0xff]
    %v124 = vld [vmem:[#allocation3 + $0x8] sm:$0xff]
    %125 = vadd.xlane.f32.xlu0 %v123
    %v126 = vpop.xlane.xlu0 %125
    %127 = vadd.xlane.f32.xlu0 %v124
    %v128 = vpop.xlane.xlu0 %127
    %v131 = vlaneseq
    %v132 = vshrl.u32 %v131, 7
    %v133 = vsub.s32 %v107, %v132
    %v134 = vrot.slane %v126, %v133
    %v135 = vlaneseq
    %v136 = vshrl.u32 %v135, 7
    %v137 = vsub.s32 %v107, %v136
    %v138 = vrot.slane %v128, %v137
    %v139 = vsel %vm116, %v138, %v134
    %v141 = vsel %vm119, %v139, 0.0
    %142 = vadd.xlane.f32.xlu0 %v141
    %v143 = vpop.xlane.xlu0 %142
    %v145 = vlaneseq
    %v146 = vshrl.u32 %v145, 7
    %v147 = vsub.s32 %v107, %v146
    %v148 = vrot.slane %v122, %v147
    %vm150 = vcmask 8192
    %151 = vst.msk [vmem:[%s2] sm:$0x1] %vm150, %v148
    %v153 = vlaneseq
    %v154 = vshrl.u32 %v153, 7
    %v155 = vsub.s32 %v107, %v154
    %v156 = vrot.slane %v143, %v155
    %158 = vst.msk [vmem:[%s3] sm:$0x1] %vm150, %v156
  $region17: #{soft_dice_loss.1} parent=0 // pred_fallthru
    _
  // Predicated region
  $region18: #{soft_dice_loss.1} parent=0 // pred_check
    _
  $region19: #{soft_dice_loss.1} parent=0 // pred_check_branch
    %160 = sbr.rel (0) target = $region21
  $region20: #{soft_dice_loss.1} parent=0 // pred_region
    _
  $region21: #{soft_dice_loss.1} parent=0 // pred_fallthru
    _
  // Predicated region
  $region22: #{soft_dice_loss.1} parent=0 // pred_check
    _
  $region23: #{soft_dice_loss.1} parent=0 // pred_check_branch
    %162 = sbr.rel (0) target = $region25
  $region24: #{soft_dice_loss.1} parent=0 // pred_region
    _
  $region25: #{soft_dice_loss.1} parent=0 // pred_fallthru
    _
  // Predicated region
  $region26: #{soft_dice_loss.1} parent=0 // pred_check
    _
  $region27: #{soft_dice_loss.1} parent=0 // pred_check_branch
    %164 = sbr.rel (0) target = $region29
  $region28: #{soft_dice_loss.1} parent=0 // pred_region
    _
  $region29: #{soft_dice_loss.1} parent=0 // pred_fallthru
    _
  // Predicated region
  $region30: #{soft_dice_loss.1} parent=0 // pred_check
    _
  $region31: #{soft_dice_loss.1} parent=0 // pred_check_branch
    %166 = sbr.rel (0) target = $region33
  $region32: #{soft_dice_loss.1} parent=0 // pred_region
    _
  $region33: #{soft_dice_loss.1} parent=0 // pred_fallthru
    _

</llo_original>
